<compile_context>
chip_gen: v7x
topology: tpu7x:2x2x1
jax: 0.10.0
libtpu: 0.0.40
codegen_flags: <defaults>
</compile_context>

<pallas_src>
import functools

import jax
import jax.numpy as jnp
from jax.experimental import pallas as pl
from jax.experimental.pallas import tpu as pltpu


LANE = 128          # hidden/action feature dims are padded to lane width
SUB = 8             # sublane granule
MAX_TILE = 512      # max rows of states per grid step for large batches
_NEG_BIG = -1e30    # logit fill for padded action lanes -> exp underflows to 0


def _round_up(x, m):
    return ((x + m - 1) // m) * m


def _choose_tile(batch):
    """Rows of states processed per grid step.

    * batch <= 128: one minimally padded tile (latency path, e.g. the B=1
      act() call) -- avoids 100-1000x padding waste and extra grid overhead.
    * batch  > 128: the tile is the lane dim of the transposed output, so it
      must be a 128-multiple; keep >= 2 tiles so v7x's two TensorCores both
      get work, cap at MAX_TILE rows/step so per-step overhead is amortized.
    """
    bp8 = _round_up(max(batch, 1), SUB)
    if bp8 <= 128:
        return bp8
    half = _round_up(-(-batch // 2), LANE)   # round_up(ceil(batch/2), 128)
    return min(MAX_TILE, half)


# ---------------------------------------------------------------------------
# Kernel: one (BT, S) tile of states -> (A8, BT) transposed probabilities
# ---------------------------------------------------------------------------
def actor_kernel(x_ref, w1_ref, b1_ref, w2_ref, b2_ref, w3_ref, b3_ref, out_ref):
    # Matmul operands in bf16 (native MXU rate on v5e/v6e/v7x, halves weight
    # DMA); accumulation + all elementwise/transcendental math stay f32.
    x = x_ref[...].astype(jnp.bfloat16)                                   # (BT, S)
    h1 = jnp.tanh(
        jnp.dot(x, w1_ref[...], preferred_element_type=jnp.float32) + b1_ref[...]
    )                                                                     # (BT, Hp) f32
    h2 = jnp.tanh(
        jnp.dot(h1.astype(jnp.bfloat16), w2_ref[...],
                preferred_element_type=jnp.float32) + b2_ref[...]
    )                                                                     # (BT, Hp) f32
    logits = (
        jnp.dot(h2.astype(jnp.bfloat16), w3_ref[...],
                preferred_element_type=jnp.float32) + b3_ref[...]
    )                                                                     # (BT, Ap) f32
    # Numerically stable softmax over the (padded) action lanes; padded lanes
    # carry a -1e30 bias so exp() underflows to exactly 0 there (f32 path).
    m = jnp.max(logits, axis=1, keepdims=True)
    e = jnp.exp(logits - m)
    d = jnp.sum(e, axis=1, keepdims=True)
    r = pl.reciprocal(d, approx=True)            # EUP slot
    r = r * (2.0 - d * r)                        # one Newton step -> ~f32-exact
    probs = e * r                                                         # (BT, Ap)
    # Transposed writeback (XLU): store only the real action sublanes ->
    # ~16x less output HBM traffic than a (BT, 128) store + wrapper slice.
    out_ref[...] = probs.T[: out_ref.shape[0], :]                         # (A8, BT)


# ---------------------------------------------------------------------------
# One-time parameter packing (transpose to (in, out), pad, bf16 weights)
# ---------------------------------------------------------------------------
def pack_params(w1, b1, w2, b2, w3, b3):
    """torch layout (out, in) -> padded, pre-transposed arrays. Done once."""
    hidden, state_dim = w1.shape
    action_dim = w3.shape[0]
    hp = _round_up(hidden, LANE)
    ap = _round_up(action_dim, LANE)
    bf16, f32 = jnp.bfloat16, jnp.float32

    w1p = jnp.zeros((state_dim, hp), bf16).at[:, :hidden].set(w1.T.astype(bf16))
    b1p = jnp.zeros((1, hp), f32).at[0, :hidden].set(b1.astype(f32))
    w2p = jnp.zeros((hp, hp), bf16).at[:hidden, :hidden].set(w2.T.astype(bf16))
    b2p = jnp.zeros((1, hp), f32).at[0, :hidden].set(b2.astype(f32))
    w3p = jnp.zeros((hp, ap), bf16).at[:hidden, :action_dim].set(w3.T.astype(bf16))
    b3p = jnp.full((1, ap), _NEG_BIG, f32).at[0, :action_dim].set(b3.astype(f32))
    return (w1p, b1p, w2p, b2p, w3p, b3p)


# ---------------------------------------------------------------------------
# Forward wrappers
# ---------------------------------------------------------------------------
@functools.partial(jax.jit, static_argnames=("action_dim",))
def actor_forward_batch(states, packed, *, action_dim):
    """states: (B, state_dim) -> (B, action_dim) probabilities."""
    w1p, b1p, w2p, b2p, w3p, b3p = packed
    states = states.astype(jnp.float32)
    batch, state_dim = states.shape
    hp = w1p.shape[1]
    ap = w3p.shape[1]
    a8 = _round_up(action_dim, SUB)

    bt = _choose_tile(batch)
    bp = _round_up(batch, bt)
    x = states if bp == batch else jnp.pad(states, ((0, bp - batch), (0, 0)))

    out = pl.pallas_call(
        actor_kernel,
        out_shape=jax.ShapeDtypeStruct((a8, bp), jnp.float32),
        grid_spec=pltpu.PrefetchScalarGridSpec(
            num_scalar_prefetch=0,
            grid=(bp // bt,),
            in_specs=[
                pl.BlockSpec((bt, state_dim), lambda i: (i, 0)),
                # Weights/biases: constant block index -> VMEM-resident.
                pl.BlockSpec((state_dim, hp), lambda i: (0, 0)),
                pl.BlockSpec((1, hp), lambda i: (0, 0)),
                pl.BlockSpec((hp, hp), lambda i: (0, 0)),
                pl.BlockSpec((1, hp), lambda i: (0, 0)),
                pl.BlockSpec((hp, ap), lambda i: (0, 0)),
                pl.BlockSpec((1, ap), lambda i: (0, 0)),
            ],
            out_specs=pl.BlockSpec((a8, bt), lambda i: (0, i)),
        ),
        compiler_params=pltpu.CompilerParams(
            dimension_semantics=("parallel",),
        ),
    )(x, w1p, b1p, w2p, b2p, w3p, b3p)
    # (a8, bp) -> (batch, action_dim); this slice+transpose is B*action_dim
    # elements, ~16x smaller than the old full-padded readback.
    return out[:action_dim, :batch].T


def actor_forward(s, packed, action_dim):
    """Exact Actor_others.forward for a 1-D state s: returns (1, action_dim)."""
    return actor_forward_batch(s.reshape(1, -1), packed, action_dim=action_dim)


# ---------------------------------------------------------------------------
# Init (mirrors torch orthogonal_init) and pure-JAX reference
# ---------------------------------------------------------------------------
def init_actor_params(key, state_dim, action_dim, hidden_width):
    k1, k2, k3 = jax.random.split(key, 3)
    ortho = jax.nn.initializers.orthogonal
    # torch nn.Linear weight shape: (out_features, in_features); bias zeros.
    w1 = ortho(1.0)(k1, (hidden_width, state_dim), jnp.float32)
    b1 = jnp.zeros((hidden_width,), jnp.float32)
    w2 = ortho(1.0)(k2, (hidden_width, hidden_width), jnp.float32)
    b2 = jnp.zeros((hidden_width,), jnp.float32)
    w3 = ortho(0.01)(k3, (action_dim, hidden_width), jnp.float32)
    b3 = jnp.zeros((action_dim,), jnp.float32)
    return w1, b1, w2, b2, w3, b3


def reference_forward_single(s, w1, b1, w2, b2, w3, b3):
    """Pure-JAX mirror of the torch forward for a 1-D input state."""
    h = jnp.tanh(w1 @ s + b1)
    h = jnp.tanh(w2 @ h + b2)
    h = h.reshape(-1, h.shape[0])          # torch: s.view(-1, len(s)); len==hidden
    logits = h @ w3.T + b3
    return jax.nn.softmax(logits, axis=1)


if __name__ == "__main__":
    state_dim, action_dim, hidden_width = 16, 8, 32

    key = jax.random.PRNGKey(0)
    kp, ks, kb = jax.random.split(key, 3)
    params = init_actor_params(kp, state_dim, action_dim, hidden_width)
    packed = pack_params(*params)

    # --- single-state call (the torch module's actual call pattern) ----------
    s = jax.random.normal(ks, (state_dim,), jnp.float32)
    p1 = jax.block_until_ready(actor_forward(s, packed, action_dim))
    ref1 = reference_forward_single(s, *params)
    assert p1.shape == (1, action_dim), p1.shape
    # tolerance accounts for bf16 matmul operands (accumulation stays f32)
    assert jnp.allclose(p1, ref1, atol=3e-3, rtol=0.0), (p1, ref1)
    assert jnp.allclose(jnp.sum(p1), 1.0, atol=1e-4)

    # --- batched call: exercises the multi-tile (2-step) grid path -----------
    B = 200
    states = jax.random.normal(kb, (B, state_dim), jnp.float32)
    pB = jax.block_until_ready(
        actor_forward_batch(states, packed, action_dim=action_dim))
    refB = jax.vmap(lambda x: reference_forward_single(x, *params)[0])(states)
    assert pB.shape == (B, action_dim), pB.shape
    assert jnp.allclose(pB, refB, atol=3e-3, rtol=0.0)
    assert jnp.allclose(jnp.sum(pB, axis=1), 1.0, atol=1e-4)

    print("KERNEL_OK")
</pallas_src>

<mosaic_0001>
module attributes {stable_mosaic.version = 11 : i64} {
  func.func @actor_kernel(%arg0: i32, %arg1: memref<8x16xf32, #tpu.memory_space<vmem>>, %arg2: memref<16x128xbf16, #tpu.memory_space<vmem>>, %arg3: memref<1x128xf32, #tpu.memory_space<vmem>>, %arg4: memref<128x128xbf16, #tpu.memory_space<vmem>>, %arg5: memref<1x128xf32, #tpu.memory_space<vmem>>, %arg6: memref<128x128xbf16, #tpu.memory_space<vmem>>, %arg7: memref<1x128xf32, #tpu.memory_space<vmem>>, %arg8: memref<8x8xf32, #tpu.memory_space<vmem>>) attributes {dimension_semantics = [#tpu.dimension_semantics<parallel>], iteration_bounds = array<i64: 1>, scalar_prefetch = 0 : i64, scratch_operands = 0 : i64, tpu.core_type = #tpu.core_type<tc>, window_params = [{transform_indices = @transform_0, window_bounds = array<i64: 8, 16>}, {pipeline_mode = #tpu.pipeline_mode<synchronous>, transform_indices = @transform_1, window_bounds = array<i64: 16, 128>}, {pipeline_mode = #tpu.pipeline_mode<synchronous>, transform_indices = @transform_2, window_bounds = array<i64: 1, 128>}, {pipeline_mode = #tpu.pipeline_mode<synchronous>, transform_indices = @transform_3, window_bounds = array<i64: 128, 128>}, {pipeline_mode = #tpu.pipeline_mode<synchronous>, transform_indices = @transform_4, window_bounds = array<i64: 1, 128>}, {pipeline_mode = #tpu.pipeline_mode<synchronous>, transform_indices = @transform_5, window_bounds = array<i64: 128, 128>}, {pipeline_mode = #tpu.pipeline_mode<synchronous>, transform_indices = @transform_6, window_bounds = array<i64: 1, 128>}, {transform_indices = @transform_7, window_bounds = array<i64: 8, 8>}]} {
    %c0 = arith.constant 0 : index
    %c0_0 = arith.constant 0 : index
    %0 = vector.load %arg1[%c0, %c0_0] : memref<8x16xf32, #tpu.memory_space<vmem>>, vector<8x16xf32>
    %1 = arith.truncf %0 : vector<8x16xf32> to vector<8x16xbf16>
    %c0_1 = arith.constant 0 : index
    %c0_2 = arith.constant 0 : index
    %2 = vector.load %arg2[%c0_1, %c0_2] : memref<16x128xbf16, #tpu.memory_space<vmem>>, vector<16x128xbf16>
    %cst = arith.constant dense<0.000000e+00> : vector<8x128xf32>
    %3 = tpu.matmul %1, %2, %cst {dimension_numbers = #tpu.dot_dimension_numbers<[1], [0], [0], [1], [0, 0, 1, 1], [], []>} : vector<8x16xbf16>, vector<16x128xbf16>, vector<8x128xf32> -> vector<8x128xf32>
    %c0_3 = arith.constant 0 : index
    %c0_4 = arith.constant 0 : index
    %4 = vector.load %arg3[%c0_3, %c0_4] : memref<1x128xf32, #tpu.memory_space<vmem>>, vector<1x128xf32>
    %5 = vector.broadcast %4 : vector<1x128xf32> to vector<8x128xf32>
    %6 = arith.addf %3, %5 : vector<8x128xf32>
    %7 = math.tanh %6 : vector<8x128xf32>
    %8 = arith.truncf %7 : vector<8x128xf32> to vector<8x128xbf16>
    %c0_5 = arith.constant 0 : index
    %c0_6 = arith.constant 0 : index
    %9 = vector.load %arg4[%c0_5, %c0_6] : memref<128x128xbf16, #tpu.memory_space<vmem>>, vector<128x128xbf16>
    %cst_7 = arith.constant dense<0.000000e+00> : vector<8x128xf32>
    %10 = tpu.matmul %8, %9, %cst_7 {dimension_numbers = #tpu.dot_dimension_numbers<[1], [0], [0], [1], [0, 0, 1, 1], [], []>} : vector<8x128xbf16>, vector<128x128xbf16>, vector<8x128xf32> -> vector<8x128xf32>
    %c0_8 = arith.constant 0 : index
    %c0_9 = arith.constant 0 : index
    %11 = vector.load %arg5[%c0_8, %c0_9] : memref<1x128xf32, #tpu.memory_space<vmem>>, vector<1x128xf32>
    %12 = vector.broadcast %11 : vector<1x128xf32> to vector<8x128xf32>
    %13 = arith.addf %10, %12 : vector<8x128xf32>
    %14 = math.tanh %13 : vector<8x128xf32>
    %15 = arith.truncf %14 : vector<8x128xf32> to vector<8x128xbf16>
    %c0_10 = arith.constant 0 : index
    %c0_11 = arith.constant 0 : index
    %16 = vector.load %arg6[%c0_10, %c0_11] : memref<128x128xbf16, #tpu.memory_space<vmem>>, vector<128x128xbf16>
    %cst_12 = arith.constant dense<0.000000e+00> : vector<8x128xf32>
    %17 = tpu.matmul %15, %16, %cst_12 {dimension_numbers = #tpu.dot_dimension_numbers<[1], [0], [0], [1], [0, 0, 1, 1], [], []>} : vector<8x128xbf16>, vector<128x128xbf16>, vector<8x128xf32> -> vector<8x128xf32>
    %c0_13 = arith.constant 0 : index
    %c0_14 = arith.constant 0 : index
    %18 = vector.load %arg7[%c0_13, %c0_14] : memref<1x128xf32, #tpu.memory_space<vmem>>, vector<1x128xf32>
    %19 = vector.broadcast %18 : vector<1x128xf32> to vector<8x128xf32>
    %20 = arith.addf %17, %19 : vector<8x128xf32>
    %cst_15 = arith.constant dense<0xFF800000> : vector<8xf32>
    %21 = vector.multi_reduction <maximumf>, %20, %cst_15 [1] : vector<8x128xf32> to vector<8xf32>
    %22 = vector.shape_cast %21 : vector<8xf32> to vector<8x1xf32>
    %23 = vector.broadcast %22 : vector<8x1xf32> to vector<8x128xf32>
    %24 = arith.subf %20, %23 : vector<8x128xf32>
    %25 = math.exp %24 : vector<8x128xf32>
    %cst_16 = arith.constant dense<0.000000e+00> : vector<8xf32>
    %26 = vector.multi_reduction <add>, %25, %cst_16 [1] : vector<8x128xf32> to vector<8xf32>
    %27 = vector.shape_cast %26 : vector<8xf32> to vector<8x1xf32>
    %28 = tpu.reciprocal %27 {approx = true} : vector<8x1xf32> -> vector<8x1xf32>
    %29 = arith.mulf %27, %28 : vector<8x1xf32>
    %cst_17 = arith.constant 2.000000e+00 : f32
    %30 = vector.broadcast %cst_17 : f32 to vector<8x1xf32>
    %31 = arith.subf %30, %29 : vector<8x1xf32>
    %32 = arith.mulf %28, %31 : vector<8x1xf32>
    %33 = vector.broadcast %32 : vector<8x1xf32> to vector<8x128xf32>
    %34 = arith.mulf %25, %33 : vector<8x128xf32>
    %35 = tpu.transpose %34, [1, 0] : vector<8x128xf32> -> vector<128x8xf32>
    %36 = vector.extract_strided_slice %35 {offsets = [0, 0], sizes = [8, 8], strides = [1, 1]} : vector<128x8xf32> to vector<8x8xf32>
    %c0_18 = arith.constant 0 : index
    %c0_19 = arith.constant 0 : index
    %37 = vector.load %arg8[%c0_18, %c0_19] : memref<8x8xf32, #tpu.memory_space<vmem>>, vector<8x8xf32>
    tpu.vector_store %arg8[%c0_18, %c0_19], %36 {strides = array<i32>} : memref<8x8xf32, #tpu.memory_space<vmem>>, vector<8x8xf32>,
    return
  }
  func.func @transform_0(%arg0: i32) -> (i32, i32) {
    %c0_i32 = arith.constant 0 : i32
    %c0_i32_0 = arith.constant 0 : i32
    return %arg0, %c0_i32 : i32, i32
  }
  func.func @transform_1(%arg0: i32) -> (i32, i32) {
    %c0_i32 = arith.constant 0 : i32
    %c0_i32_0 = arith.constant 0 : i32
    %c0_i32_1 = arith.constant 0 : i32
    return %c0_i32, %c0_i32_0 : i32, i32
  }
  func.func @transform_2(%arg0: i32) -> (i32, i32) {
    %c0_i32 = arith.constant 0 : i32
    %c0_i32_0 = arith.constant 0 : i32
    %c0_i32_1 = arith.constant 0 : i32
    return %c0_i32, %c0_i32_0 : i32, i32
  }
  func.func @transform_3(%arg0: i32) -> (i32, i32) {
    %c0_i32 = arith.constant 0 : i32
    %c0_i32_0 = arith.constant 0 : i32
    %c0_i32_1 = arith.constant 0 : i32
    return %c0_i32, %c0_i32_0 : i32, i32
  }
  func.func @transform_4(%arg0: i32) -> (i32, i32) {
    %c0_i32 = arith.constant 0 : i32
    %c0_i32_0 = arith.constant 0 : i32
    %c0_i32_1 = arith.constant 0 : i32
    return %c0_i32, %c0_i32_0 : i32, i32
  }
  func.func @transform_5(%arg0: i32) -> (i32, i32) {
    %c0_i32 = arith.constant 0 : i32
    %c0_i32_0 = arith.constant 0 : i32
    %c0_i32_1 = arith.constant 0 : i32
    return %c0_i32, %c0_i32_0 : i32, i32
  }
  func.func @transform_6(%arg0: i32) -> (i32, i32) {
    %c0_i32 = arith.constant 0 : i32
    %c0_i32_0 = arith.constant 0 : i32
    %c0_i32_1 = arith.constant 0 : i32
    return %c0_i32, %c0_i32_0 : i32, i32
  }
  func.func @transform_7(%arg0: i32) -> (i32, i32) {
    %c0_i32 = arith.constant 0 : i32
    %c0_i32_0 = arith.constant 0 : i32
    return %c0_i32, %arg0 : i32, i32
  }
}

</mosaic_0001>

<llo_original>
// kernel: actor_forward_batch.1
$region0: #{actor_forward_batch.1}
  #allocation0 [shape = 'u32[]', space=smem, size = 0x4, offset = 0x4, fixed_abs, tag = 'smem constant byte address 0x4 - core index']
  #allocation1 [shape = 'u32[144,128]{1,0:T(1,128)}', space=vmem, size = 0x12000, scoped, tag = 'internal scratch']
  %s0 = inlined_call_operand.vmem [shape: f32[8,16], index: 0, kind: input, shape index: {}]
  %s1 = inlined_call_operand.vmem [shape: bf16[16,128], index: 1, kind: input, shape index: {}]
  %s2 = inlined_call_operand.vmem [shape: f32[1,128], index: 2, kind: input, shape index: {}]
  %s3 = inlined_call_operand.hbm [shape: bf16[128,128], index: 3, kind: input, shape index: {}]
  %s4 = inlined_call_operand.vmem [shape: f32[1,128], index: 4, kind: input, shape index: {}]
  %s5 = inlined_call_operand.hbm [shape: bf16[128,128], index: 5, kind: input, shape index: {}]
  %s6 = inlined_call_operand.vmem [shape: f32[1,128], index: 6, kind: input, shape index: {}]
  %s7 = inlined_call_operand.vmem [shape: f32[8,8], index: 7, kind: output, shape index: {}]
  %s8 = sld [smem:[#allocation0]]
  $region46: #{actor_forward_batch.1} parent=0
    _
  %s10 = ssub.s32 1, %s8
  %s11 = scalar_select 0, %s10, %s8
  $region1: #{actor_forward_batch.1} parent=0
    #allocation2 [shape = 'u8[32768]{0}', space=vmem, size = 0x8000, scoped, tag = 'input window, operand 3, single buffered']
    #allocation3 [shape = 's32[1]{0}', space=sflag, size = 0x4, scoped, tag = 'scoped memory for actor_forward_batch.1']
    #allocation4 [shape = 'u8[32768]{0}', space=vmem, size = 0x8000, scoped, tag = 'input window, operand 5, single buffered']
    #allocation5 [shape = 's32[1]{0}', space=sflag, size = 0x4, scoped, tag = 'scoped memory for actor_forward_batch.1']
    %12 = vsyncpa [#allocation3], 0
    %13 = vsyncpa [#allocation5], 0
    // Predicated region
    $region2: #{actor_forward_batch.1} parent=1 // pred_check
      _
    $region3: #{actor_forward_batch.1} parent=1 // pred_check_branch
      %15 = sbr.rel (0) target = $region5
    $region4: #{actor_forward_batch.1} parent=1 // pred_region
      _
    $region5: #{actor_forward_batch.1} parent=1 // pred_fallthru
      _
    // Predicated region
    $region6: #{actor_forward_batch.1} parent=1 // pred_check
      _
    $region7: #{actor_forward_batch.1} parent=1 // pred_check_branch
      %17 = sbr.rel (0) target = $region9
    $region8: #{actor_forward_batch.1} parent=1 // pred_region
      _
    $region9: #{actor_forward_batch.1} parent=1 // pred_fallthru
      _
    // Predicated region
    $region10: #{actor_forward_batch.1} parent=1 // pred_check
      _
    $region11: #{actor_forward_batch.1} parent=1 // pred_check_branch
      %19 = sbr.rel (0) target = $region13
    $region12: #{actor_forward_batch.1} parent=1 // pred_region
      _
    $region13: #{actor_forward_batch.1} parent=1 // pred_fallthru
      _
    // Predicated region
    $region14: #{actor_forward_batch.1} parent=1 // pred_check
      _
    $region15: #{actor_forward_batch.1} parent=1 // pred_check_branch
      %21 = sbr.rel (0) target = $region17
    $region16: #{actor_forward_batch.1} parent=1 // pred_region
      %s23 = ssub.s32 1024, 1024
      %24 = vsyncadd [#allocation3], %s23
      %s25 = sshll.u32 [#allocation2], 4
      %s26 = int_to_ptr.vmem [resolvable:$true] %s25
      %31 = dma.hbm_to_vmem [thread:$0]  %s3, 1024, %s26, [#allocation3], 64, 64, 4
    $region17: #{actor_forward_batch.1} parent=1 // pred_fallthru
      _
    // Predicated region
    $region18: #{actor_forward_batch.1} parent=1 // pred_check
      _
    $region19: #{actor_forward_batch.1} parent=1 // pred_check_branch
      %33 = sbr.rel (0) target = $region21
    $region20: #{actor_forward_batch.1} parent=1 // pred_region
      _
    $region21: #{actor_forward_batch.1} parent=1 // pred_fallthru
      _
    // Predicated region
    $region22: #{actor_forward_batch.1} parent=1 // pred_check
      _
    $region23: #{actor_forward_batch.1} parent=1 // pred_check_branch
      %35 = sbr.rel (0) target = $region25
    $region24: #{actor_forward_batch.1} parent=1 // pred_region
      %s37 = ssub.s32 1024, 1024
      %38 = vsyncadd [#allocation5], %s37
      %s39 = sshll.u32 [#allocation4], 4
      %s40 = int_to_ptr.vmem [resolvable:$true] %s39
      %45 = dma.hbm_to_vmem [thread:$0]  %s5, 1024, %s40, [#allocation5], 64, 64, 4
    $region25: #{actor_forward_batch.1} parent=1 // pred_fallthru
      _
    // Predicated region
    $region26: #{actor_forward_batch.1} parent=1 // pred_check
      _
    $region27: #{actor_forward_batch.1} parent=1 // pred_check_branch
      %47 = sbr.rel (0) target = $region29
    $region28: #{actor_forward_batch.1} parent=1 // pred_region
      _
    $region29: #{actor_forward_batch.1} parent=1 // pred_fallthru
      _
    // Predicated region
    $region30: #{actor_forward_batch.1} parent=1 // pred_check
      _
    $region31: #{actor_forward_batch.1} parent=1 // pred_check_branch
      %49 = sbr.rel (0) target = $region33
    $region32: #{actor_forward_batch.1} parent=1 // pred_region
      %50 = dma.done [#allocation3], 1024
    $region33: #{actor_forward_batch.1} parent=1 // pred_fallthru
      _
    // Predicated region
    $region34: #{actor_forward_batch.1} parent=1 // pred_check
      _
    $region35: #{actor_forward_batch.1} parent=1 // pred_check_branch
      %52 = sbr.rel (0) target = $region37
    $region36: #{actor_forward_batch.1} parent=1 // pred_region
      %53 = dma.done [#allocation5], 1024
    $region37: #{actor_forward_batch.1} parent=1 // pred_fallthru
      _
    %v55 = vld [vmem:[%s0] sm:$0xff]
    %v56 = vpack.c.bf16 %v55, %v55
    %v57 = vld [vmem:[%s1] sm:$0xf]
    %v58 = vld [vmem:[%s1 + $0x4] sm:$0xf]
    %v59 = vld [vmem:[%s2] sm:$0x1]
    %v61 = vlaneseq
    %v62 = vshrl.u32 %v61, 7
    %v63 = vsub.s32 0, %v62
    %v64 = vrot.slane %v59, %v63
    %v68 = vunpack.c.l.b16 %v57
    %v69 = vunpack.c.l.b16 %v58
    %v70 = vpack.c.b16 %v69, %v68
    %vm72 = vcmask 130048
    %v74 = vsel %vm72, %v56, 0
    %76 = vmatprep.subr.bf16.mxu0 0
    %77 = vmatpush1.bf16.msra.mxu0 %v70
    %78 = vmatprep.subr.bf16.mxu0 0
    %79 = vmatpush1.bf16.msra.mxu0 0
    %80 = vmatprep.subr.bf16.mxu0 0
    %81 = vmatpush1.bf16.msra.mxu0 0
    %82 = vmatprep.subr.bf16.mxu0 0
    %83 = vmatpush1.bf16.msra.mxu0 0
    %84 = vmatprep.subr.bf16.mxu0 0
    %85 = vmatpush1.bf16.msra.mxu0 0
    %86 = vmatprep.subr.bf16.mxu0 0
    %87 = vmatpush1.bf16.msra.mxu0 0
    %88 = vmatprep.subr.bf16.mxu0 0
    %89 = vmatpush1.bf16.msra.mxu0 0
    %90 = vmatprep.subr.bf16.mxu0 0
    %91 = vmatpush1.bf16.msra.mxu0 0
    %92 = vmatprep.subr.bf16.mxu0 0
    %93 = vmatpush1.bf16.msra.mxu0 0
    %94 = vmatprep.subr.bf16.mxu0 0
    %95 = vmatpush1.bf16.msra.mxu0 0
    %96 = vmatprep.subr.bf16.mxu0 0
    %97 = vmatpush1.bf16.msra.mxu0 0
    %98 = vmatprep.subr.bf16.mxu0 0
    %99 = vmatpush1.bf16.msra.mxu0 0
    %100 = vmatprep.subr.bf16.mxu0 0
    %101 = vmatpush1.bf16.msra.mxu0 0
    %102 = vmatprep.subr.bf16.mxu0 0
    %103 = vmatpush1.bf16.msra.mxu0 0
    %104 = vmatprep.subr.bf16.mxu0 0
    %105 = vmatpush1.bf16.msra.mxu0 0
    %106 = vmatprep.subr.bf16.mxu0 0
    %107 = vmatpush1.bf16.msra.mxu0 0
    %108 = vmatprep.mubr.bf16.mxu0 0
    %109 = vmatmul.mubr.bf16.gmra.mrb[0].mxu0 %v74
    %v110 = vpop.f32.mrb[0].mxu0
    %v111 = vadd.f32 %v64, %v110
    %v112 = vpop.f32.mrb[0].mxu0
    %v113 = vpop.f32.mrb[0].mxu0
    %v114 = vpop.f32.mrb[0].mxu0
    %115 = vdwg.mxu0
    %v116 = vtanh.pop %v111
    %v117 = vpack.c.bf16 %v116, %v116
    %v118 = vld [vmem:[#allocation2] sm:$0xf]
    %v119 = vld [vmem:[#allocation2 + $0x4] sm:$0xf]
    %v120 = vld [vmem:[#allocation2 + $0x8] sm:$0xf]
    %v121 = vld [vmem:[#allocation2 + $0xc] sm:$0xf]
    %v122 = vld [vmem:[#allocation2 + $0x10] sm:$0xf]
    %v123 = vld [vmem:[#allocation2 + $0x14] sm:$0xf]
    %v124 = vld [vmem:[#allocation2 + $0x18] sm:$0xf]
    %v125 = vld [vmem:[#allocation2 + $0x1c] sm:$0xf]
    %v126 = vld [vmem:[#allocation2 + $0x20] sm:$0xf]
    %v127 = vld [vmem:[#allocation2 + $0x24] sm:$0xf]
    %v128 = vld [vmem:[#allocation2 + $0x28] sm:$0xf]
    %v129 = vld [vmem:[#allocation2 + $0x2c] sm:$0xf]
    %v130 = vld [vmem:[#allocation2 + $0x30] sm:$0xf]
    %v131 = vld [vmem:[#allocation2 + $0x34] sm:$0xf]
    %v132 = vld [vmem:[#allocation2 + $0x38] sm:$0xf]
    %v133 = vld [vmem:[#allocation2 + $0x3c] sm:$0xf]
    %v134 = vld [vmem:[%s4] sm:$0x1]
    %v136 = vlaneseq
    %v137 = vshrl.u32 %v136, 7
    %v138 = vsub.s32 0, %v137
    %v139 = vrot.slane %v134, %v138
    %v157 = vunpack.c.l.b16 %v118
    %v158 = vunpack.c.l.b16 %v119
    %v159 = vunpack.c.l.b16 %v120
    %v160 = vunpack.c.l.b16 %v121
    %v161 = vunpack.c.l.b16 %v122
    %v162 = vunpack.c.l.b16 %v123
    %v163 = vunpack.c.l.b16 %v124
    %v164 = vunpack.c.l.b16 %v125
    %v165 = vunpack.c.l.b16 %v126
    %v166 = vunpack.c.l.b16 %v127
    %v167 = vunpack.c.l.b16 %v128
    %v168 = vunpack.c.l.b16 %v129
    %v169 = vunpack.c.l.b16 %v130
    %v170 = vunpack.c.l.b16 %v131
    %v171 = vunpack.c.l.b16 %v132
    %v172 = vunpack.c.l.b16 %v133
    %v173 = vpack.c.b16 %v158, %v157
    %v174 = vpack.c.b16 %v160, %v159
    %v175 = vpack.c.b16 %v162, %v161
    %v176 = vpack.c.b16 %v164, %v163
    %v177 = vpack.c.b16 %v166, %v165
    %v178 = vpack.c.b16 %v168, %v167
    %v179 = vpack.c.b16 %v170, %v169
    %v180 = vpack.c.b16 %v172, %v171
    %189 = vmatprep.subr.bf16.mxu0 0
    %190 = vmatpush1.bf16.msra.mxu0 %v173
    %191 = vmatprep.subr.bf16.mxu0 0
    %192 = vmatpush1.bf16.msra.mxu0 %v174
    %193 = vmatprep.subr.bf16.mxu0 0
    %194 = vmatpush1.bf16.msra.mxu0 %v175
    %195 = vmatprep.subr.bf16.mxu0 0
    %196 = vmatpush1.bf16.msra.mxu0 %v176
    %197 = vmatprep.subr.bf16.mxu0 0
    %198 = vmatpush1.bf16.msra.mxu0 %v177
    %199 = vmatprep.subr.bf16.mxu0 0
    %200 = vmatpush1.bf16.msra.mxu0 %v178
    %201 = vmatprep.subr.bf16.mxu0 0
    %202 = vmatpush1.bf16.msra.mxu0 %v179
    %203 = vmatprep.subr.bf16.mxu0 0
    %204 = vmatpush1.bf16.msra.mxu0 %v180
    %205 = vmatprep.subr.bf16.mxu0 0
    %206 = vmatpush1.bf16.msra.mxu0 0
    %207 = vmatprep.subr.bf16.mxu0 0
    %208 = vmatpush1.bf16.msra.mxu0 0
    %209 = vmatprep.subr.bf16.mxu0 0
    %210 = vmatpush1.bf16.msra.mxu0 0
    %211 = vmatprep.subr.bf16.mxu0 0
    %212 = vmatpush1.bf16.msra.mxu0 0
    %213 = vmatprep.subr.bf16.mxu0 0
    %214 = vmatpush1.bf16.msra.mxu0 0
    %215 = vmatprep.subr.bf16.mxu0 0
    %216 = vmatpush1.bf16.msra.mxu0 0
    %217 = vmatprep.subr.bf16.mxu0 0
    %218 = vmatpush1.bf16.msra.mxu0 0
    %219 = vmatprep.subr.bf16.mxu0 0
    %220 = vmatpush1.bf16.msra.mxu0 0
    %221 = vmatprep.mubr.bf16.mxu0 0
    %222 = vmatmul.mubr.bf16.gmra.mrb[0].mxu0 %v117
    %v223 = vpop.f32.mrb[0].mxu0
    %v224 = vadd.f32 %v139, %v223
    %v225 = vpop.f32.mrb[0].mxu0
    %v226 = vpop.f32.mrb[0].mxu0
    %v227 = vpop.f32.mrb[0].mxu0
    %228 = vdwg.mxu0
    %v229 = vtanh.pop %v224
    %v230 = vpack.c.bf16 %v229, %v229
    %v231 = vld [vmem:[#allocation4] sm:$0xf]
    %v232 = vld [vmem:[#allocation4 + $0x4] sm:$0xf]
    %v233 = vld [vmem:[#allocation4 + $0x8] sm:$0xf]
    %v234 = vld [vmem:[#allocation4 + $0xc] sm:$0xf]
    %v235 = vld [vmem:[#allocation4 + $0x10] sm:$0xf]
    %v236 = vld [vmem:[#allocation4 + $0x14] sm:$0xf]
    %v237 = vld [vmem:[#allocation4 + $0x18] sm:$0xf]
    %v238 = vld [vmem:[#allocation4 + $0x1c] sm:$0xf]
    %v239 = vld [vmem:[#allocation4 + $0x20] sm:$0xf]
    %v240 = vld [vmem:[#allocation4 + $0x24] sm:$0xf]
    %v241 = vld [vmem:[#allocation4 + $0x28] sm:$0xf]
    %v242 = vld [vmem:[#allocation4 + $0x2c] sm:$0xf]
    %v243 = vld [vmem:[#allocation4 + $0x30] sm:$0xf]
    %v244 = vld [vmem:[#allocation4 + $0x34] sm:$0xf]
    %v245 = vld [vmem:[#allocation4 + $0x38] sm:$0xf]
    %v246 = vld [vmem:[#allocation4 + $0x3c] sm:$0xf]
    %v247 = vld [vmem:[%s6] sm:$0x1]
    %v249 = vlaneseq
    %v250 = vshrl.u32 %v249, 7
    %v251 = vsub.s32 0, %v250
    %v252 = vrot.slane %v247, %v251
    %v270 = vunpack.c.l.b16 %v231
    %v271 = vunpack.c.l.b16 %v232
    %v272 = vunpack.c.l.b16 %v233
    %v273 = vunpack.c.l.b16 %v234
    %v274 = vunpack.c.l.b16 %v235
    %v275 = vunpack.c.l.b16 %v236
    %v276 = vunpack.c.l.b16 %v237
    %v277 = vunpack.c.l.b16 %v238
    %v278 = vunpack.c.l.b16 %v239
    %v279 = vunpack.c.l.b16 %v240
    %v280 = vunpack.c.l.b16 %v241
    %v281 = vunpack.c.l.b16 %v242
    %v282 = vunpack.c.l.b16 %v243
    %v283 = vunpack.c.l.b16 %v244
    %v284 = vunpack.c.l.b16 %v245
    %v285 = vunpack.c.l.b16 %v246
    %v286 = vpack.c.b16 %v271, %v270
    %v287 = vpack.c.b16 %v273, %v272
    %v288 = vpack.c.b16 %v275, %v274
    %v289 = vpack.c.b16 %v277, %v276
    %v290 = vpack.c.b16 %v279, %v278
    %v291 = vpack.c.b16 %v281, %v280
    %v292 = vpack.c.b16 %v283, %v282
    %v293 = vpack.c.b16 %v285, %v284
    %302 = vmatprep.subr.bf16.mxu0 0
    %303 = vmatpush1.bf16.msra.mxu0 %v286
    %304 = vmatprep.subr.bf16.mxu0 0
    %305 = vmatpush1.bf16.msra.mxu0 %v287
    %306 = vmatprep.subr.bf16.mxu0 0
    %307 = vmatpush1.bf16.msra.mxu0 %v288
    %308 = vmatprep.subr.bf16.mxu0 0
    %309 = vmatpush1.bf16.msra.mxu0 %v289
    %310 = vmatprep.subr.bf16.mxu0 0
    %311 = vmatpush1.bf16.msra.mxu0 %v290
    %312 = vmatprep.subr.bf16.mxu0 0
    %313 = vmatpush1.bf16.msra.mxu0 %v291
    %314 = vmatprep.subr.bf16.mxu0 0
    %315 = vmatpush1.bf16.msra.mxu0 %v292
    %316 = vmatprep.subr.bf16.mxu0 0
    %317 = vmatpush1.bf16.msra.mxu0 %v293
    %318 = vmatprep.subr.bf16.mxu0 0
    %319 = vmatpush1.bf16.msra.mxu0 0
    %320 = vmatprep.subr.bf16.mxu0 0
    %321 = vmatpush1.bf16.msra.mxu0 0
    %322 = vmatprep.subr.bf16.mxu0 0
    %323 = vmatpush1.bf16.msra.mxu0 0
    %324 = vmatprep.subr.bf16.mxu0 0
    %325 = vmatpush1.bf16.msra.mxu0 0
    %326 = vmatprep.subr.bf16.mxu0 0
    %327 = vmatpush1.bf16.msra.mxu0 0
    %328 = vmatprep.subr.bf16.mxu0 0
    %329 = vmatpush1.bf16.msra.mxu0 0
    %330 = vmatprep.subr.bf16.mxu0 0
    %331 = vmatpush1.bf16.msra.mxu0 0
    %332 = vmatprep.subr.bf16.mxu0 0
    %333 = vmatpush1.bf16.msra.mxu0 0
    %334 = vmatprep.mubr.bf16.mxu0 0
    %335 = vmatmul.mubr.bf16.gmra.mrb[0].mxu0 %v230
    %v336 = vpop.f32.mrb[0].mxu0
    %v337 = vadd.f32 %v252, %v336
    %v338 = vpop.f32.mrb[0].mxu0
    %v339 = vpop.f32.mrb[0].mxu0
    %v340 = vpop.f32.mrb[0].mxu0
    %341 = vdwg.mxu0
    %342 = vmax.xlane.f32.xlu0 %v337
    %v343 = vpop.xlane.xlu0 %342
    %v344 = vsub.f32 %v337, %v343
    %v345 = vmul.f32 %v344, 1.442695
    %v346 = vpow.pop %v345
    %347 = vadd.xlane.f32.xlu0 %v346
    %v348 = vpop.xlane.xlu0 %347
    %v349 = vrcp.pop %v348
    %v350 = vmul.f32 %v348, %v349
    %v351 = vsub.f32 2.0, %v350
    %v352 = vmul.f32 %v349, %v351
    %v353 = vmul.f32 %v346, %v352
    %354 = vxpose.xlu0.b32.start [1/16] %v353, 128
    %355 = vxpose.xlu0.b32.cont [2/16] 0.0, 128
    %356 = vxpose.xlu0.b32.cont [3/16] 0.0, 128
    %357 = vxpose.xlu0.b32.cont [4/16] 0.0, 128
    %358 = vxpose.xlu0.b32.cont [5/16] 0.0, 128
    %359 = vxpose.xlu0.b32.cont [6/16] 0.0, 128
    %360 = vxpose.xlu0.b32.cont [7/16] 0.0, 128
    %361 = vxpose.xlu0.b32.cont [8/16] 0.0, 128
    %362 = vxpose.xlu0.b32.cont [9/16] 0.0, 128
    %363 = vxpose.xlu0.b32.cont [10/16] 0.0, 128
    %364 = vxpose.xlu0.b32.cont [11/16] 0.0, 128
    %365 = vxpose.xlu0.b32.cont [12/16] 0.0, 128
    %366 = vxpose.xlu0.b32.cont [13/16] 0.0, 128
    %367 = vxpose.xlu0.b32.cont [14/16] 0.0, 128
    %368 = vxpose.xlu0.b32.cont [15/16] 0.0, 128
    %369 = vxpose.xlu0.b32.end [16/16] 0.0, 128
    %v370 = vpop.trf.xlu0
    %v371 = vpop.trf.xlu0
    %v372 = vpop.trf.xlu0
    %v373 = vpop.trf.xlu0
    %v374 = vpop.trf.xlu0
    %v375 = vpop.trf.xlu0
    %v376 = vpop.trf.xlu0
    %v377 = vpop.trf.xlu0
    %v378 = vpop.trf.xlu0
    %v379 = vpop.trf.xlu0
    %v380 = vpop.trf.xlu0
    %v381 = vpop.trf.xlu0
    %v382 = vpop.trf.xlu0
    %v383 = vpop.trf.xlu0
    %v384 = vpop.trf.xlu0
    %v385 = vpop.trf.xlu0
    %vm386 = vcmask 64512
    %387 = vst.msk [vmem:[%s7] sm:$0xff] %vm386, %v370
    // Predicated region
    $region38: #{actor_forward_batch.1} parent=1 // pred_check
      _
    $region39: #{actor_forward_batch.1} parent=1 // pred_check_branch
      %389 = sbr.rel (0) target = $region41
    $region40: #{actor_forward_batch.1} parent=1 // pred_region
      _
    $region41: #{actor_forward_batch.1} parent=1 // pred_fallthru
      _
    // Predicated region
    $region42: #{actor_forward_batch.1} parent=1 // pred_check
      _
    $region43: #{actor_forward_batch.1} parent=1 // pred_check_branch
      %391 = sbr.rel (0) target = $region45
    $region44: #{actor_forward_batch.1} parent=1 // pred_region
      _
    $region45: #{actor_forward_batch.1} parent=1 // pred_fallthru
      _
    %392 = vsyncpa [#allocation3], 1
    %393 = vsyncpa [#allocation5], 1

</llo_original>
